<compile_context>
chip_gen: v7x
topology: tpu7x:2x2x1
jax: 0.10.0
libtpu: 0.0.40
codegen_flags: <defaults>
</compile_context>

<pallas_src>
import jax
import jax.numpy as jnp
from jax.experimental import pallas as pl
from jax.experimental.pallas import tpu as pltpu


# ----------------------------------------------------------------------------
# Kernels
# ----------------------------------------------------------------------------
def _make_channel_kernel(c_in, c_out, use_mxu):
    """(N, C, HW) layout: channels on sublanes, spatial columns on lanes."""

    def kernel(x2_ref, w_ref, b_ref, x1_ref, o_ref):
        x2 = x2_ref[0]                      # (C_in, T), native dtype (no f32 copy)
        w = w_ref[...]                      # (C_out, C_in)
        b = b_ref[...]                      # (C_out, 1), f32
        if use_mxu:
            # Native-dtype MXU matmul (bf16 rate for bf16 inputs), f32 accumulate.
            y = jnp.dot(w, x2, preferred_element_type=jnp.float32)
        else:
            # Tiny channel count with ragged HW: short VPU FMA chain (w is f32).
            y = w[:, 0:1] * x2[0:1, :]
            for ci in range(1, c_in):
                y = y + w[:, ci:ci + 1] * x2[ci:ci + 1, :]
        y = jnp.tanh(y + b)                 # f32 bias add + tanh (EUP slot)
        o_ref[0] = (x1_ref[0] * y).astype(o_ref.dtype)

    return kernel


def _make_dense_vpu_kernel(c_in, c_out):
    """(N, C, S, 128) layout for small C: each channel's (S, 128) tile is fully
    sublane/lane dense; scalar weights/bias are read from SMEM and broadcast."""

    def kernel(x2_ref, w_ref, b_ref, x1_ref, o_ref):
        for co in range(c_out):
            acc = w_ref[co, 0] * x2_ref[0, 0]          # f32 scalar * native tile
            for ci in range(1, c_in):
                acc = acc + w_ref[co, ci] * x2_ref[0, ci]
            y = jnp.tanh(acc + b_ref[co])               # f32
            o_ref[0, co] = (x1_ref[0, co] * y).astype(o_ref.dtype)

    return kernel


# ----------------------------------------------------------------------------
# Sizing policy
# ----------------------------------------------------------------------------
def _vmem_capacity_bytes():
    try:
        info = pltpu.get_tpu_info()
        cap = getattr(info, "vmem_capacity_bytes", None)
        if cap:
            return int(cap)
    except Exception:
        pass
    try:
        kind = jax.devices()[0].device_kind.lower()
        if "v7" in kind:
            return 64 << 20
    except Exception:
        pass
    return 128 << 20


def _sublane(dt):
    return max(1, 32 // jnp.dtype(dt).itemsize)


def _per_column_bytes(c_in, c_out, x2_dt, x1_dt, out_dt):
    """Per-spatial-column VMEM bytes per grid step (double-buffered streams +
    f32 compute temporaries), with channel counts rounded up to sublane tiles."""
    def padded(c, dt):
        s = _sublane(dt)
        return pl.cdiv(c, s) * s

    stream = 2 * (padded(c_in, x2_dt) * jnp.dtype(x2_dt).itemsize
                  + padded(c_out, x1_dt) * jnp.dtype(x1_dt).itemsize
                  + padded(c_out, out_dt) * jnp.dtype(out_dt).itemsize)
    temps = (c_in + 2 * c_out) * 4          # f32 y + epilogue temporaries
    return int(stream + temps)


def _fixed_bytes(c_in, c_out):
    """Double-buffered W / bias VMEM tiles (padded to (8, 128) f32)."""
    w = pl.cdiv(c_out, 8) * 8 * pl.cdiv(c_in, 128) * 128 * 4
    b = pl.cdiv(c_out, 8) * 8 * 128 * 4
    return int(2 * (w + b))


def _pick_tile_cols(HW, N, per_col_bytes, fixed_bytes, budget_bytes, num_cores):
    hw_ceil = pl.cdiv(HW, 128) * 128
    avail = max(budget_bytes - fixed_bytes, 128 * per_col_bytes)
    tile = (avail // per_col_bytes) // 128 * 128
    tile = int(max(128, min(tile, hw_ceil, 1 << 16)))
    budget_tile = tile
    # Enough grid steps for DMA/compute overlap; on v7x also for both TCs.
    target_steps = max(4, 2 * num_cores) if num_cores >= 2 else 2
    min_tile = max(128, min(512, hw_ceil))   # 512-lane tiles ~85% HBM roofline
    while N * pl.cdiv(HW, tile) < target_steps and tile > min_tile:
        tile = max(min_tile, ((tile // 2 + 127) // 128) * 128)
    return tile, tile < budget_tile


# ----------------------------------------------------------------------------
# Wrapper
# ----------------------------------------------------------------------------
def info_communicate(feature_x1, feature_x2, weight, bias):
    """feature_x1: (N, C_out, H, W), feature_x2: (N, C_in, H, W),
    weight: (C_out, C_in) or (C_out, C_in, 1, 1), bias: (C_out,).
    Returns feature_x1 * tanh(conv1x1(feature_x2))."""
    if weight.ndim == 4:
        weight = weight.reshape(weight.shape[0], weight.shape[1])
    N, c_in, H, W = feature_x2.shape
    c_out = weight.shape[0]
    assert feature_x1.shape == (N, c_out, H, W)
    assert weight.shape == (c_out, c_in)
    assert bias.shape == (c_out,)
    HW = H * W

    # Generation-aware VMEM policy.
    cap = _vmem_capacity_bytes()
    if cap >= (96 << 20):          # v5e / v6e class: 128 MiB VMEM, 1 TensorCore
        vmem_limit = 64 << 20
        budget = 24 << 20
        num_cores = 1
    else:                           # v7x class: 64 MiB VMEM, 2 TensorCores
        vmem_limit = 32 << 20
        budget = 12 << 20
        num_cores = 2

    per_col = _per_column_bytes(c_in, c_out, feature_x2.dtype,
                                feature_x1.dtype, feature_x1.dtype)
    fixed = _fixed_bytes(c_in, c_out)
    tile_cols, shrunk = _pick_tile_cols(HW, N, per_col, fixed, budget, num_cores)
    # 3-deep input buffering only where tiles were shrunk for step count (v7x).
    pipe = pl.Buffered(3) if (num_cores >= 2 and shrunk) else None

    use_mxu = c_in >= 8
    dense_small_c = (not use_mxu) and (HW % 128 == 0)

    compiler_params = pltpu.CompilerParams(
        dimension_semantics=("parallel", "parallel"),
        vmem_limit_bytes=vmem_limit,
    )

    def _spec(block_shape, index_map, pm=None):
        if pm is None:
            return pl.BlockSpec(block_shape, index_map)
        return pl.BlockSpec(block_shape, index_map, pipeline_mode=pm)

    if dense_small_c:
        # Small C, HW multiple of 128: sublane/lane-dense per-channel tiles.
        S = HW // 128
        s_tile = max(1, tile_cols // 128)
        if s_tile >= S:
            s_tile = S
        elif s_tile % 8 != 0:
            s_tile = max(8, (s_tile // 8) * 8)

        x2 = feature_x2.reshape(N, c_in, S, 128)
        x1 = feature_x1.reshape(N, c_out, S, 128)
        w_smem = weight.astype(jnp.float32)
        b_smem = bias.astype(jnp.float32)

        out = pl.pallas_call(
            _make_dense_vpu_kernel(c_in, c_out),
            out_shape=jax.ShapeDtypeStruct((N, c_out, S, 128), feature_x1.dtype),
            grid_spec=pltpu.PrefetchScalarGridSpec(
                num_scalar_prefetch=0,
                grid=(N, pl.cdiv(S, s_tile)),
                in_specs=[
                    _spec((1, c_in, s_tile, 128), lambda n, j: (n, 0, j, 0), pipe),
                    pl.BlockSpec(memory_space=pltpu.MemorySpace.SMEM),   # W
                    pl.BlockSpec(memory_space=pltpu.MemorySpace.SMEM),   # bias
                    _spec((1, c_out, s_tile, 128), lambda n, j: (n, 0, j, 0), pipe),
                ],
                out_specs=pl.BlockSpec((1, c_out, s_tile, 128),
                                       lambda n, j: (n, 0, j, 0)),
            ),
            compiler_params=compiler_params,
        )(x2, w_smem, b_smem, x1)
        return out.reshape(N, c_out, H, W)

    # MXU path (c_in >= 8) and small-C fallback for ragged HW.
    x2 = feature_x2.reshape(N, c_in, HW)
    x1 = feature_x1.reshape(N, c_out, HW)
    if use_mxu:
        w_arg = weight.astype(feature_x2.dtype)   # native-dtype MXU operands
    else:
        w_arg = weight.astype(jnp.float32)        # f32 VPU accumulation
    b_col = bias.astype(jnp.float32).reshape(c_out, 1)

    out = pl.pallas_call(
        _make_channel_kernel(c_in, c_out, use_mxu),
        out_shape=jax.ShapeDtypeStruct((N, c_out, HW), feature_x1.dtype),
        grid_spec=pltpu.PrefetchScalarGridSpec(
            num_scalar_prefetch=0,
            grid=(N, pl.cdiv(HW, tile_cols)),
            in_specs=[
                _spec((1, c_in, tile_cols), lambda n, j: (n, 0, j), pipe),   # x2
                pl.BlockSpec((c_out, c_in), lambda n, j: (0, 0)),            # W
                pl.BlockSpec((c_out, 1), lambda n, j: (0, 0)),               # bias
                _spec((1, c_out, tile_cols), lambda n, j: (n, 0, j), pipe),  # x1
            ],
            out_specs=pl.BlockSpec((1, c_out, tile_cols), lambda n, j: (n, 0, j)),
        ),
        compiler_params=compiler_params,
    )(x2, w_arg, b_col, x1)
    return out.reshape(N, c_out, H, W)


# ----------------------------------------------------------------------------
# Reference + test harness
# ----------------------------------------------------------------------------
def reference_info_communicate(feature_x1, feature_x2, weight, bias):
    y = jnp.einsum("nchw,oc->nohw", feature_x2, weight) + bias[None, :, None, None]
    return feature_x1 * jnp.tanh(y)


def _make_inputs(key, n, c_in, c_out, h, w):
    k1, k2, k3, k4 = jax.random.split(key, 4)
    fx1 = jax.random.normal(k1, (n, c_out, h, w), dtype=jnp.float32)
    fx2 = jax.random.normal(k2, (n, c_in, h, w), dtype=jnp.float32)
    bound = 1.0 / (c_in ** 0.5)   # PyTorch Conv2d default init bound scale
    wgt = jax.random.uniform(k3, (c_out, c_in), minval=-bound, maxval=bound,
                             dtype=jnp.float32)
    b = jax.random.uniform(k4, (c_out,), minval=-bound, maxval=bound,
                           dtype=jnp.float32)
    return fx1, fx2, wgt, b


if __name__ == "__main__":
    key = jax.random.PRNGKey(0)
    kA, kB, kC = jax.random.split(key, 3)

    # 1) Module-sized inputs; C=4, HW=256 -> dense small-C VPU path.
    fx1, fx2, wgt, b = _make_inputs(kA, 2, 4, 4, 16, 16)
    out = jax.block_until_ready(info_communicate(fx1, fx2, wgt, b))
    ref = reference_info_communicate(fx1, fx2, wgt, b)
    assert out.shape == (2, 4, 16, 16)
    assert jnp.allclose(out, ref, atol=1e-5, rtol=1e-5)

    # 2) Ragged spatial size (H*W=117) + ragged channels -> VPU fallback path
    #    with a partial tail block / masked writes.
    fx1b, fx2b, wgtb, bb = _make_inputs(kB, 1, 3, 5, 9, 13)
    out2 = jax.block_until_ready(info_communicate(fx1b, fx2b, wgtb, bb))
    ref2 = reference_info_communicate(fx1b, fx2b, wgtb, bb)
    assert out2.shape == (1, 5, 9, 13)
    assert jnp.allclose(out2, ref2, atol=1e-5, rtol=1e-5)

    # 3) c_in >= 8 -> MXU path (native-dtype operands, f32 accumulation),
    #    partial spatial tail (H*W=160).
    fx1c, fx2c, wgtc, bc = _make_inputs(kC, 2, 16, 8, 8, 20)
    out3 = jax.block_until_ready(info_communicate(fx1c, fx2c, wgtc, bc))
    ref3 = reference_info_communicate(fx1c, fx2c, wgtc, bc)
    assert out3.shape == (2, 8, 8, 20)
    assert jnp.allclose(out3, ref3, atol=1e-4, rtol=1e-4)

    print("KERNEL_OK")
</pallas_src>

<mosaic_0001>
module attributes {stable_mosaic.version = 11 : i64} {
  func.func @kernel(%arg0: i32, %arg1: i32, %arg2: memref<1x4x2x128xf32, #tpu.memory_space<vmem>>, %arg3: memref<4x4xf32, #tpu.memory_space<smem>>, %arg4: memref<4xf32, #tpu.memory_space<smem>>, %arg5: memref<1x4x2x128xf32, #tpu.memory_space<vmem>>, %arg6: memref<1x4x2x128xf32, #tpu.memory_space<vmem>>) attributes {dimension_semantics = [#tpu.dimension_semantics<parallel>, #tpu.dimension_semantics<parallel>], iteration_bounds = array<i64: 2, 1>, scalar_prefetch = 0 : i64, scratch_operands = 0 : i64, tpu.core_type = #tpu.core_type<tc>, window_params = [{transform_indices = @transform_0, window_bounds = array<i64: 1, 4, 2, 128>}, {transform_indices = @transform_1, window_bounds = array<i64: 4, 4>}, {transform_indices = @transform_2, window_bounds = array<i64: 4>}, {transform_indices = @transform_3, window_bounds = array<i64: 1, 4, 2, 128>}, {transform_indices = @transform_4, window_bounds = array<i64: 1, 4, 2, 128>}]} {
    %c0 = arith.constant 0 : index
    %c0_0 = arith.constant 0 : index
    %0 = memref.load %arg3[%c0, %c0_0] : memref<4x4xf32, #tpu.memory_space<smem>>
    %c0_1 = arith.constant 0 : index
    %c0_2 = arith.constant 0 : index
    %c0_3 = arith.constant 0 : index
    %c0_4 = arith.constant 0 : index
    %1 = vector.load %arg2[%c0_1, %c0_2, %c0_3, %c0_4] : memref<1x4x2x128xf32, #tpu.memory_space<vmem>>, vector<1x1x2x128xf32>
    %2 = vector.shape_cast %1 : vector<1x1x2x128xf32> to vector<2x128xf32>
    %3 = vector.broadcast %0 : f32 to vector<2x128xf32>
    %4 = arith.mulf %3, %2 : vector<2x128xf32>
    %c0_5 = arith.constant 0 : index
    %c1 = arith.constant 1 : index
    %5 = memref.load %arg3[%c0_5, %c1] : memref<4x4xf32, #tpu.memory_space<smem>>
    %c0_6 = arith.constant 0 : index
    %c1_7 = arith.constant 1 : index
    %c0_8 = arith.constant 0 : index
    %c0_9 = arith.constant 0 : index
    %6 = vector.load %arg2[%c0_6, %c1_7, %c0_8, %c0_9] : memref<1x4x2x128xf32, #tpu.memory_space<vmem>>, vector<1x1x2x128xf32>
    %7 = vector.shape_cast %6 : vector<1x1x2x128xf32> to vector<2x128xf32>
    %8 = vector.broadcast %5 : f32 to vector<2x128xf32>
    %9 = arith.mulf %8, %7 : vector<2x128xf32>
    %10 = arith.addf %4, %9 : vector<2x128xf32>
    %c0_10 = arith.constant 0 : index
    %c2 = arith.constant 2 : index
    %11 = memref.load %arg3[%c0_10, %c2] : memref<4x4xf32, #tpu.memory_space<smem>>
    %c0_11 = arith.constant 0 : index
    %c2_12 = arith.constant 2 : index
    %c0_13 = arith.constant 0 : index
    %c0_14 = arith.constant 0 : index
    %12 = vector.load %arg2[%c0_11, %c2_12, %c0_13, %c0_14] : memref<1x4x2x128xf32, #tpu.memory_space<vmem>>, vector<1x1x2x128xf32>
    %13 = vector.shape_cast %12 : vector<1x1x2x128xf32> to vector<2x128xf32>
    %14 = vector.broadcast %11 : f32 to vector<2x128xf32>
    %15 = arith.mulf %14, %13 : vector<2x128xf32>
    %16 = arith.addf %10, %15 : vector<2x128xf32>
    %c0_15 = arith.constant 0 : index
    %c3 = arith.constant 3 : index
    %17 = memref.load %arg3[%c0_15, %c3] : memref<4x4xf32, #tpu.memory_space<smem>>
    %c0_16 = arith.constant 0 : index
    %c3_17 = arith.constant 3 : index
    %c0_18 = arith.constant 0 : index
    %c0_19 = arith.constant 0 : index
    %18 = vector.load %arg2[%c0_16, %c3_17, %c0_18, %c0_19] : memref<1x4x2x128xf32, #tpu.memory_space<vmem>>, vector<1x1x2x128xf32>
    %19 = vector.shape_cast %18 : vector<1x1x2x128xf32> to vector<2x128xf32>
    %20 = vector.broadcast %17 : f32 to vector<2x128xf32>
    %21 = arith.mulf %20, %19 : vector<2x128xf32>
    %22 = arith.addf %16, %21 : vector<2x128xf32>
    %c0_20 = arith.constant 0 : index
    %23 = memref.load %arg4[%c0_20] : memref<4xf32, #tpu.memory_space<smem>>
    %24 = vector.broadcast %23 : f32 to vector<2x128xf32>
    %25 = arith.addf %22, %24 : vector<2x128xf32>
    %26 = math.tanh %25 : vector<2x128xf32>
    %c0_21 = arith.constant 0 : index
    %c0_22 = arith.constant 0 : index
    %c0_23 = arith.constant 0 : index
    %c0_24 = arith.constant 0 : index
    %27 = vector.load %arg5[%c0_21, %c0_22, %c0_23, %c0_24] : memref<1x4x2x128xf32, #tpu.memory_space<vmem>>, vector<1x1x2x128xf32>
    %28 = vector.shape_cast %27 : vector<1x1x2x128xf32> to vector<2x128xf32>
    %29 = arith.mulf %28, %26 : vector<2x128xf32>
    %c0_25 = arith.constant 0 : index
    %c0_26 = arith.constant 0 : index
    %c0_27 = arith.constant 0 : index
    %c0_28 = arith.constant 0 : index
    %30 = vector.load %arg6[%c0_25, %c0_26, %c0_27, %c0_28] : memref<1x4x2x128xf32, #tpu.memory_space<vmem>>, vector<1x1x2x128xf32>
    %31 = vector.shape_cast %30 : vector<1x1x2x128xf32> to vector<2x128xf32>
    %32 = vector.shape_cast %29 : vector<2x128xf32> to vector<1x1x2x128xf32>
    tpu.vector_store %arg6[%c0_25, %c0_26, %c0_27, %c0_28], %32 {strides = array<i32>} : memref<1x4x2x128xf32, #tpu.memory_space<vmem>>, vector<1x1x2x128xf32>,
    %c1_29 = arith.constant 1 : index
    %c0_30 = arith.constant 0 : index
    %33 = memref.load %arg3[%c1_29, %c0_30] : memref<4x4xf32, #tpu.memory_space<smem>>
    %c0_31 = arith.constant 0 : index
    %c0_32 = arith.constant 0 : index
    %c0_33 = arith.constant 0 : index
    %c0_34 = arith.constant 0 : index
    %34 = vector.load %arg2[%c0_31, %c0_32, %c0_33, %c0_34] : memref<1x4x2x128xf32, #tpu.memory_space<vmem>>, vector<1x1x2x128xf32>
    %35 = vector.shape_cast %34 : vector<1x1x2x128xf32> to vector<2x128xf32>
    %36 = vector.broadcast %33 : f32 to vector<2x128xf32>
    %37 = arith.mulf %36, %35 : vector<2x128xf32>
    %c1_35 = arith.constant 1 : index
    %c1_36 = arith.constant 1 : index
    %38 = memref.load %arg3[%c1_35, %c1_36] : memref<4x4xf32, #tpu.memory_space<smem>>
    %c0_37 = arith.constant 0 : index
    %c1_38 = arith.constant 1 : index
    %c0_39 = arith.constant 0 : index
    %c0_40 = arith.constant 0 : index
    %39 = vector.load %arg2[%c0_37, %c1_38, %c0_39, %c0_40] : memref<1x4x2x128xf32, #tpu.memory_space<vmem>>, vector<1x1x2x128xf32>
    %40 = vector.shape_cast %39 : vector<1x1x2x128xf32> to vector<2x128xf32>
    %41 = vector.broadcast %38 : f32 to vector<2x128xf32>
    %42 = arith.mulf %41, %40 : vector<2x128xf32>
    %43 = arith.addf %37, %42 : vector<2x128xf32>
    %c1_41 = arith.constant 1 : index
    %c2_42 = arith.constant 2 : index
    %44 = memref.load %arg3[%c1_41, %c2_42] : memref<4x4xf32, #tpu.memory_space<smem>>
    %c0_43 = arith.constant 0 : index
    %c2_44 = arith.constant 2 : index
    %c0_45 = arith.constant 0 : index
    %c0_46 = arith.constant 0 : index
    %45 = vector.load %arg2[%c0_43, %c2_44, %c0_45, %c0_46] : memref<1x4x2x128xf32, #tpu.memory_space<vmem>>, vector<1x1x2x128xf32>
    %46 = vector.shape_cast %45 : vector<1x1x2x128xf32> to vector<2x128xf32>
    %47 = vector.broadcast %44 : f32 to vector<2x128xf32>
    %48 = arith.mulf %47, %46 : vector<2x128xf32>
    %49 = arith.addf %43, %48 : vector<2x128xf32>
    %c1_47 = arith.constant 1 : index
    %c3_48 = arith.constant 3 : index
    %50 = memref.load %arg3[%c1_47, %c3_48] : memref<4x4xf32, #tpu.memory_space<smem>>
    %c0_49 = arith.constant 0 : index
    %c3_50 = arith.constant 3 : index
    %c0_51 = arith.constant 0 : index
    %c0_52 = arith.constant 0 : index
    %51 = vector.load %arg2[%c0_49, %c3_50, %c0_51, %c0_52] : memref<1x4x2x128xf32, #tpu.memory_space<vmem>>, vector<1x1x2x128xf32>
    %52 = vector.shape_cast %51 : vector<1x1x2x128xf32> to vector<2x128xf32>
    %53 = vector.broadcast %50 : f32 to vector<2x128xf32>
    %54 = arith.mulf %53, %52 : vector<2x128xf32>
    %55 = arith.addf %49, %54 : vector<2x128xf32>
    %c1_53 = arith.constant 1 : index
    %56 = memref.load %arg4[%c1_53] : memref<4xf32, #tpu.memory_space<smem>>
    %57 = vector.broadcast %56 : f32 to vector<2x128xf32>
    %58 = arith.addf %55, %57 : vector<2x128xf32>
    %59 = math.tanh %58 : vector<2x128xf32>
    %c0_54 = arith.constant 0 : index
    %c1_55 = arith.constant 1 : index
    %c0_56 = arith.constant 0 : index
    %c0_57 = arith.constant 0 : index
    %60 = vector.load %arg5[%c0_54, %c1_55, %c0_56, %c0_57] : memref<1x4x2x128xf32, #tpu.memory_space<vmem>>, vector<1x1x2x128xf32>
    %61 = vector.shape_cast %60 : vector<1x1x2x128xf32> to vector<2x128xf32>
    %62 = arith.mulf %61, %59 : vector<2x128xf32>
    %c0_58 = arith.constant 0 : index
    %c1_59 = arith.constant 1 : index
    %c0_60 = arith.constant 0 : index
    %c0_61 = arith.constant 0 : index
    %63 = vector.load %arg6[%c0_58, %c1_59, %c0_60, %c0_61] : memref<1x4x2x128xf32, #tpu.memory_space<vmem>>, vector<1x1x2x128xf32>
    %64 = vector.shape_cast %63 : vector<1x1x2x128xf32> to vector<2x128xf32>
    %65 = vector.shape_cast %62 : vector<2x128xf32> to vector<1x1x2x128xf32>
    tpu.vector_store %arg6[%c0_58, %c1_59, %c0_60, %c0_61], %65 {strides = array<i32>} : memref<1x4x2x128xf32, #tpu.memory_space<vmem>>, vector<1x1x2x128xf32>,
    %c2_62 = arith.constant 2 : index
    %c0_63 = arith.constant 0 : index
    %66 = memref.load %arg3[%c2_62, %c0_63] : memref<4x4xf32, #tpu.memory_space<smem>>
    %c0_64 = arith.constant 0 : index
    %c0_65 = arith.constant 0 : index
    %c0_66 = arith.constant 0 : index
    %c0_67 = arith.constant 0 : index
    %67 = vector.load %arg2[%c0_64, %c0_65, %c0_66, %c0_67] : memref<1x4x2x128xf32, #tpu.memory_space<vmem>>, vector<1x1x2x128xf32>
    %68 = vector.shape_cast %67 : vector<1x1x2x128xf32> to vector<2x128xf32>
    %69 = vector.broadcast %66 : f32 to vector<2x128xf32>
    %70 = arith.mulf %69, %68 : vector<2x128xf32>
    %c2_68 = arith.constant 2 : index
    %c1_69 = arith.constant 1 : index
    %71 = memref.load %arg3[%c2_68, %c1_69] : memref<4x4xf32, #tpu.memory_space<smem>>
    %c0_70 = arith.constant 0 : index
    %c1_71 = arith.constant 1 : index
    %c0_72 = arith.constant 0 : index
    %c0_73 = arith.constant 0 : index
    %72 = vector.load %arg2[%c0_70, %c1_71, %c0_72, %c0_73] : memref<1x4x2x128xf32, #tpu.memory_space<vmem>>, vector<1x1x2x128xf32>
    %73 = vector.shape_cast %72 : vector<1x1x2x128xf32> to vector<2x128xf32>
    %74 = vector.broadcast %71 : f32 to vector<2x128xf32>
    %75 = arith.mulf %74, %73 : vector<2x128xf32>
    %76 = arith.addf %70, %75 : vector<2x128xf32>
    %c2_74 = arith.constant 2 : index
    %c2_75 = arith.constant 2 : index
    %77 = memref.load %arg3[%c2_74, %c2_75] : memref<4x4xf32, #tpu.memory_space<smem>>
    %c0_76 = arith.constant 0 : index
    %c2_77 = arith.constant 2 : index
    %c0_78 = arith.constant 0 : index
    %c0_79 = arith.constant 0 : index
    %78 = vector.load %arg2[%c0_76, %c2_77, %c0_78, %c0_79] : memref<1x4x2x128xf32, #tpu.memory_space<vmem>>, vector<1x1x2x128xf32>
    %79 = vector.shape_cast %78 : vector<1x1x2x128xf32> to vector<2x128xf32>
    %80 = vector.broadcast %77 : f32 to vector<2x128xf32>
    %81 = arith.mulf %80, %79 : vector<2x128xf32>
    %82 = arith.addf %76, %81 : vector<2x128xf32>
    %c2_80 = arith.constant 2 : index
    %c3_81 = arith.constant 3 : index
    %83 = memref.load %arg3[%c2_80, %c3_81] : memref<4x4xf32, #tpu.memory_space<smem>>
    %c0_82 = arith.constant 0 : index
    %c3_83 = arith.constant 3 : index
    %c0_84 = arith.constant 0 : index
    %c0_85 = arith.constant 0 : index
    %84 = vector.load %arg2[%c0_82, %c3_83, %c0_84, %c0_85] : memref<1x4x2x128xf32, #tpu.memory_space<vmem>>, vector<1x1x2x128xf32>
    %85 = vector.shape_cast %84 : vector<1x1x2x128xf32> to vector<2x128xf32>
    %86 = vector.broadcast %83 : f32 to vector<2x128xf32>
    %87 = arith.mulf %86, %85 : vector<2x128xf32>
    %88 = arith.addf %82, %87 : vector<2x128xf32>
    %c2_86 = arith.constant 2 : index
    %89 = memref.load %arg4[%c2_86] : memref<4xf32, #tpu.memory_space<smem>>
    %90 = vector.broadcast %89 : f32 to vector<2x128xf32>
    %91 = arith.addf %88, %90 : vector<2x128xf32>
    %92 = math.tanh %91 : vector<2x128xf32>
    %c0_87 = arith.constant 0 : index
    %c2_88 = arith.constant 2 : index
    %c0_89 = arith.constant 0 : index
    %c0_90 = arith.constant 0 : index
    %93 = vector.load %arg5[%c0_87, %c2_88, %c0_89, %c0_90] : memref<1x4x2x128xf32, #tpu.memory_space<vmem>>, vector<1x1x2x128xf32>
    %94 = vector.shape_cast %93 : vector<1x1x2x128xf32> to vector<2x128xf32>
    %95 = arith.mulf %94, %92 : vector<2x128xf32>
    %c0_91 = arith.constant 0 : index
    %c2_92 = arith.constant 2 : index
    %c0_93 = arith.constant 0 : index
    %c0_94 = arith.constant 0 : index
    %96 = vector.load %arg6[%c0_91, %c2_92, %c0_93, %c0_94] : memref<1x4x2x128xf32, #tpu.memory_space<vmem>>, vector<1x1x2x128xf32>
    %97 = vector.shape_cast %96 : vector<1x1x2x128xf32> to vector<2x128xf32>
    %98 = vector.shape_cast %95 : vector<2x128xf32> to vector<1x1x2x128xf32>
    tpu.vector_store %arg6[%c0_91, %c2_92, %c0_93, %c0_94], %98 {strides = array<i32>} : memref<1x4x2x128xf32, #tpu.memory_space<vmem>>, vector<1x1x2x128xf32>,
    %c3_95 = arith.constant 3 : index
    %c0_96 = arith.constant 0 : index
    %99 = memref.load %arg3[%c3_95, %c0_96] : memref<4x4xf32, #tpu.memory_space<smem>>
    %c0_97 = arith.constant 0 : index
    %c0_98 = arith.constant 0 : index
    %c0_99 = arith.constant 0 : index
    %c0_100 = arith.constant 0 : index
    %100 = vector.load %arg2[%c0_97, %c0_98, %c0_99, %c0_100] : memref<1x4x2x128xf32, #tpu.memory_space<vmem>>, vector<1x1x2x128xf32>
    %101 = vector.shape_cast %100 : vector<1x1x2x128xf32> to vector<2x128xf32>
    %102 = vector.broadcast %99 : f32 to vector<2x128xf32>
    %103 = arith.mulf %102, %101 : vector<2x128xf32>
    %c3_101 = arith.constant 3 : index
    %c1_102 = arith.constant 1 : index
    %104 = memref.load %arg3[%c3_101, %c1_102] : memref<4x4xf32, #tpu.memory_space<smem>>
    %c0_103 = arith.constant 0 : index
    %c1_104 = arith.constant 1 : index
    %c0_105 = arith.constant 0 : index
    %c0_106 = arith.constant 0 : index
    %105 = vector.load %arg2[%c0_103, %c1_104, %c0_105, %c0_106] : memref<1x4x2x128xf32, #tpu.memory_space<vmem>>, vector<1x1x2x128xf32>
    %106 = vector.shape_cast %105 : vector<1x1x2x128xf32> to vector<2x128xf32>
    %107 = vector.broadcast %104 : f32 to vector<2x128xf32>
    %108 = arith.mulf %107, %106 : vector<2x128xf32>
    %109 = arith.addf %103, %108 : vector<2x128xf32>
    %c3_107 = arith.constant 3 : index
    %c2_108 = arith.constant 2 : index
    %110 = memref.load %arg3[%c3_107, %c2_108] : memref<4x4xf32, #tpu.memory_space<smem>>
    %c0_109 = arith.constant 0 : index
    %c2_110 = arith.constant 2 : index
    %c0_111 = arith.constant 0 : index
    %c0_112 = arith.constant 0 : index
    %111 = vector.load %arg2[%c0_109, %c2_110, %c0_111, %c0_112] : memref<1x4x2x128xf32, #tpu.memory_space<vmem>>, vector<1x1x2x128xf32>
    %112 = vector.shape_cast %111 : vector<1x1x2x128xf32> to vector<2x128xf32>
    %113 = vector.broadcast %110 : f32 to vector<2x128xf32>
    %114 = arith.mulf %113, %112 : vector<2x128xf32>
    %115 = arith.addf %109, %114 : vector<2x128xf32>
    %c3_113 = arith.constant 3 : index
    %c3_114 = arith.constant 3 : index
    %116 = memref.load %arg3[%c3_113, %c3_114] : memref<4x4xf32, #tpu.memory_space<smem>>
    %c0_115 = arith.constant 0 : index
    %c3_116 = arith.constant 3 : index
    %c0_117 = arith.constant 0 : index
    %c0_118 = arith.constant 0 : index
    %117 = vector.load %arg2[%c0_115, %c3_116, %c0_117, %c0_118] : memref<1x4x2x128xf32, #tpu.memory_space<vmem>>, vector<1x1x2x128xf32>
    %118 = vector.shape_cast %117 : vector<1x1x2x128xf32> to vector<2x128xf32>
    %119 = vector.broadcast %116 : f32 to vector<2x128xf32>
    %120 = arith.mulf %119, %118 : vector<2x128xf32>
    %121 = arith.addf %115, %120 : vector<2x128xf32>
    %c3_119 = arith.constant 3 : index
    %122 = memref.load %arg4[%c3_119] : memref<4xf32, #tpu.memory_space<smem>>
    %123 = vector.broadcast %122 : f32 to vector<2x128xf32>
    %124 = arith.addf %121, %123 : vector<2x128xf32>
    %125 = math.tanh %124 : vector<2x128xf32>
    %c0_120 = arith.constant 0 : index
    %c3_121 = arith.constant 3 : index
    %c0_122 = arith.constant 0 : index
    %c0_123 = arith.constant 0 : index
    %126 = vector.load %arg5[%c0_120, %c3_121, %c0_122, %c0_123] : memref<1x4x2x128xf32, #tpu.memory_space<vmem>>, vector<1x1x2x128xf32>
    %127 = vector.shape_cast %126 : vector<1x1x2x128xf32> to vector<2x128xf32>
    %128 = arith.mulf %127, %125 : vector<2x128xf32>
    %c0_124 = arith.constant 0 : index
    %c3_125 = arith.constant 3 : index
    %c0_126 = arith.constant 0 : index
    %c0_127 = arith.constant 0 : index
    %129 = vector.load %arg6[%c0_124, %c3_125, %c0_126, %c0_127] : memref<1x4x2x128xf32, #tpu.memory_space<vmem>>, vector<1x1x2x128xf32>
    %130 = vector.shape_cast %129 : vector<1x1x2x128xf32> to vector<2x128xf32>
    %131 = vector.shape_cast %128 : vector<2x128xf32> to vector<1x1x2x128xf32>
    tpu.vector_store %arg6[%c0_124, %c3_125, %c0_126, %c0_127], %131 {strides = array<i32>} : memref<1x4x2x128xf32, #tpu.memory_space<vmem>>, vector<1x1x2x128xf32>,
    return
  }
  func.func @transform_0(%arg0: i32, %arg1: i32) -> (i32, i32, i32, i32) {
    %c0_i32 = arith.constant 0 : i32
    %c0_i32_0 = arith.constant 0 : i32
    %c0_i32_1 = arith.constant 0 : i32
    return %arg0, %c0_i32, %arg1, %c0_i32_0 : i32, i32, i32, i32
  }
  func.func @transform_1(%arg0: i32, %arg1: i32) -> (i32, i32) {
    %c0_i32 = arith.constant 0 : i32
    %c0_i32_0 = arith.constant 0 : i32
    %c0_i32_1 = arith.constant 0 : i32
    return %c0_i32, %c0_i32_0 : i32, i32
  }
  func.func @transform_2(%arg0: i32, %arg1: i32) -> i32 {
    %c0_i32 = arith.constant 0 : i32
    %c0_i32_0 = arith.constant 0 : i32
    return %c0_i32 : i32
  }
  func.func @transform_3(%arg0: i32, %arg1: i32) -> (i32, i32, i32, i32) {
    %c0_i32 = arith.constant 0 : i32
    %c0_i32_0 = arith.constant 0 : i32
    %c0_i32_1 = arith.constant 0 : i32
    return %arg0, %c0_i32, %arg1, %c0_i32_0 : i32, i32, i32, i32
  }
  func.func @transform_4(%arg0: i32, %arg1: i32) -> (i32, i32, i32, i32) {
    %c0_i32 = arith.constant 0 : i32
    %c0_i32_0 = arith.constant 0 : i32
    %c0_i32_1 = arith.constant 0 : i32
    return %arg0, %c0_i32, %arg1, %c0_i32_0 : i32, i32, i32, i32
  }
}

</mosaic_0001>

<llo_original>
// kernel: tpu_custom_call.1
$region0: #{tpu_custom_call.1}
  #allocation0 [shape = 'u32[]', space=smem, size = 0x4, offset = 0x4, fixed_abs, tag = 'smem constant byte address 0x4 - core index']
  #allocation1 [shape = 'u32[144,128]{1,0:T(1,128)}', space=vmem, size = 0x12000, scoped, tag = 'internal scratch']
  %s0 = inlined_call_operand.hbm [shape: f32[2,4,2,128], index: 0, kind: input, shape index: {}]
  %s1 = inlined_call_operand.hbm [shape: f32[4,4], index: 1, kind: input, shape index: {}]
  %s2 = inlined_call_operand.hbm [shape: f32[4], index: 2, kind: input, shape index: {}]
  %s3 = inlined_call_operand.hbm [shape: f32[2,4,2,128], index: 3, kind: input, shape index: {}]
  %s4 = inlined_call_operand.hbm [shape: f32[2,4,2,128], index: 4, kind: output, shape index: {}]
  %s5 = sld [smem:[#allocation0]]
  $region65: #{tpu_custom_call.1} parent=0
    _
  %s7 = ssub.s32 1, %s5
  %s8 = scalar_select 0, %s7, %s5
  $region1: #{tpu_custom_call.1} parent=0
    #allocation2 [shape = 'u8[8192]{0}', space=vmem, size = 0x2000, scoped, tag = 'input window, operand 0']
    #allocation3 [shape = 's32[2]{0}', space=sflag, size = 0x8, scoped, tag = 'scoped memory for tpu_custom_call.1']
    #allocation4 [shape = 's32[2]{0}', space=sflag, size = 0x8, scoped, tag = 'scoped memory for tpu_custom_call.1']
    #allocation5 [shape = 's32[2]{0}', space=sflag, size = 0x8, scoped, tag = 'scoped memory for tpu_custom_call.1']
    #allocation6 [shape = 'u8[2048]{0}', space=smem, size = 0x800, scoped, tag = 'input window, operand 1, single buffered']
    #allocation7 [shape = 'u8[512]{0}', space=smem, size = 0x200, scoped, tag = 'input window, operand 2, single buffered']
    #allocation8 [shape = 's32[1]{0}', space=sflag, size = 0x4, scoped, tag = 'scoped memory for tpu_custom_call.1']
    #allocation9 [shape = 'u8[8192]{0}', space=vmem, size = 0x2000, scoped, tag = 'input window, operand 3']
    #allocation10 [shape = 's32[2]{0}', space=sflag, size = 0x8, scoped, tag = 'scoped memory for tpu_custom_call.1']
    #allocation11 [shape = 'u8[8192]{0}', space=vmem, size = 0x2000, scoped, tag = 'output window, operand 0']
    %9 = vsyncpa [#allocation3], 0
    %s10 = scalar_lea.sflag [#allocation3], 1
    %11 = vsyncpa %s10, 0
    %12 = vsyncpa [#allocation5], 0
    %13 = vsyncpa [#allocation8], 0
    %14 = vsyncpa [#allocation10], 0
    %s15 = scalar_lea.sflag [#allocation10], 1
    %16 = vsyncpa %s15, 0
    %17 = vsyncpa [#allocation4], 0
    %s18 = scalar_lea.sflag [#allocation4], 1
    %19 = vsyncpa %s18, 0
    loop: start=0, step=1, limit=4
    $region2: #{tpu_custom_call.1} parent=1 // loop_pre_header
      _
    $region3: #{tpu_custom_call.1} parent=1 // loop_header
      %s21 = sphi 0, %s25
      %p22 = scmp.ge.s32.totalorder %s21, 4
      %s28 = sphi 0, %s40
      %s29 = sphi 0, %s36
      %s30 = sphi 0, %s28
      %s31 = sphi 0, %s29
      %s32 = sphi 0, %s30
      %s33 = sphi 0, %s31
      %s45 = sphi 0, %s47
      %s48 = sphi 0, %s45
      %s49 = sphi 0, %s48
      %s65 = sphi 0, %s49
      %s69 = sphi 0, %s69
      %s71 = sphi 0, %s69
      %s72 = sphi 0, %s71
      %s86 = sphi 0, %s72
      %s90 = sphi 0, %s90
      %s92 = sphi 0, %s90
      %s93 = sphi 0, %s92
      %s107 = sphi 0, %s93
      %s115 = sphi 0, %s117
      %s118 = sphi 0, %s115
      %s119 = sphi 0, %s118
      %s135 = sphi 0, %s119
      %s143 = sphi 0, %s145
      %s146 = sphi 0, %s143
      %s147 = sphi 0, %s146
      %s163 = sphi 0, %s147
    $region4: #{tpu_custom_call.1} parent=1 // loop_header_branch
      %24 = sbr.rel (%p22) target = $region8
    $region5: #{tpu_custom_call.1} parent=1 // loop_body
      %s26 = ssub.s32 %s21, 1
      %s27 = ssub.s32 %s21, 2
      %s34 = sadd.s32 1, %s29
      %p35 = scmp.ge.s32.totalorder %s34, 1
      %s36 = scalar_select %p35, 0, %s34
      %s37 = sadd.s32 1, %s28
      %s38 = scalar_select %p35, %s37, %s28
      %p39 = scmp.ge.s32.totalorder %s38, 2
      %s40 = scalar_select %p39, 0, %s38
      %s41 = ssub.s32 %s28, %s40
      %s42 = ssub.s32 %s29, %s36
      %s43 = sor.u32 %s41, %s42
      %p44 = scmp.eq.s32.totalorder %s43, 0
      %s46 = sadd.s32 %s45, 1
      %s47 = scalar_select %p44, %s45, %s46
      %p50 = pneg %p44
      %p51 = scmp.eq.s32.totalorder %s21, 1
      %p52 = por %p50, %p51
      %p53 = scmp.ne.s32.totalorder %s45, %s48
      %p54 = scmp.eq.s32.totalorder %s21, 0
      %p55 = por %p53, %p54
      %p56 = scmp.ne.s32.totalorder %s45, %s48
      %p57 = scmp.eq.s32.totalorder %s26, 1
      %p58 = por %p56, %p57
      %p59 = scmp.ne.s32.totalorder %s48, %s49
      %p60 = scmp.eq.s32.totalorder %s26, 0
      %p61 = por %p59, %p60
      %p62 = scmp.ne.s32.totalorder %s48, %s49
      %p63 = scmp.eq.s32.totalorder %s27, 1
      %p64 = por %p62, %p63
      %p66 = scmp.ne.s32.totalorder %s49, %s65
      %p67 = scmp.eq.s32.totalorder %s27, 0
      %p68 = por %p66, %p67
      %s70 = sadd.s32 %s69, 1
      %p73 = scmp.eq.s32.totalorder %s21, 1
      %p74 = scmp.ne.s32.totalorder %s69, %s71
      %p75 = scmp.eq.s32.totalorder %s21, 0
      %p76 = por %p74, %p75
      %p77 = scmp.ne.s32.totalorder %s69, %s71
      %p78 = scmp.eq.s32.totalorder %s26, 1
      %p79 = por %p77, %p78
      %p80 = scmp.ne.s32.totalorder %s71, %s72
      %p81 = scmp.eq.s32.totalorder %s26, 0
      %p82 = por %p80, %p81
      %p83 = scmp.ne.s32.totalorder %s71, %s72
      %p84 = scmp.eq.s32.totalorder %s27, 1
      %p85 = por %p83, %p84
      %p87 = scmp.ne.s32.totalorder %s72, %s86
      %p88 = scmp.eq.s32.totalorder %s27, 0
      %p89 = por %p87, %p88
      %s91 = sadd.s32 %s90, 1
      %p94 = scmp.eq.s32.totalorder %s21, 1
      %p95 = scmp.ne.s32.totalorder %s90, %s92
      %p96 = scmp.eq.s32.totalorder %s21, 0
      %p97 = por %p95, %p96
      %p98 = scmp.ne.s32.totalorder %s90, %s92
      %p99 = scmp.eq.s32.totalorder %s26, 1
      %p100 = por %p98, %p99
      %p101 = scmp.ne.s32.totalorder %s92, %s93
      %p102 = scmp.eq.s32.totalorder %s26, 0
      %p103 = por %p101, %p102
      %p104 = scmp.ne.s32.totalorder %s92, %s93
      %p105 = scmp.eq.s32.totalorder %s27, 1
      %p106 = por %p104, %p105
      %p108 = scmp.ne.s32.totalorder %s93, %s107
      %p109 = scmp.eq.s32.totalorder %s27, 0
      %p110 = por %p108, %p109
      %s111 = ssub.s32 %s28, %s40
      %s112 = ssub.s32 %s29, %s36
      %s113 = sor.u32 %s111, %s112
      %p114 = scmp.eq.s32.totalorder %s113, 0
      %s116 = sadd.s32 %s115, 1
      %s117 = scalar_select %p114, %s115, %s116
      %p120 = pneg %p114
      %p121 = scmp.eq.s32.totalorder %s21, 1
      %p122 = por %p120, %p121
      %p123 = scmp.ne.s32.totalorder %s115, %s118
      %p124 = scmp.eq.s32.totalorder %s21, 0
      %p125 = por %p123, %p124
      %p126 = scmp.ne.s32.totalorder %s115, %s118
      %p127 = scmp.eq.s32.totalorder %s26, 1
      %p128 = por %p126, %p127
      %p129 = scmp.ne.s32.totalorder %s118, %s119
      %p130 = scmp.eq.s32.totalorder %s26, 0
      %p131 = por %p129, %p130
      %p132 = scmp.ne.s32.totalorder %s118, %s119
      %p133 = scmp.eq.s32.totalorder %s27, 1
      %p134 = por %p132, %p133
      %p136 = scmp.ne.s32.totalorder %s119, %s135
      %p137 = scmp.eq.s32.totalorder %s27, 0
      %p138 = por %p136, %p137
      %s139 = ssub.s32 %s28, %s40
      %s140 = ssub.s32 %s29, %s36
      %s141 = sor.u32 %s139, %s140
      %p142 = scmp.eq.s32.totalorder %s141, 0
      %s144 = sadd.s32 %s143, 1
      %s145 = scalar_select %p142, %s143, %s144
      %p148 = pneg %p142
      %p149 = scmp.eq.s32.totalorder %s21, 1
      %p150 = por %p148, %p149
      %p151 = scmp.ne.s32.totalorder %s143, %s146
      %p152 = scmp.eq.s32.totalorder %s21, 0
      %p153 = por %p151, %p152
      %p154 = scmp.ne.s32.totalorder %s143, %s146
      %p155 = scmp.eq.s32.totalorder %s26, 1
      %p156 = por %p154, %p155
      %p157 = scmp.ne.s32.totalorder %s146, %s147
      %p158 = scmp.eq.s32.totalorder %s26, 0
      %p159 = por %p157, %p158
      %p160 = scmp.ne.s32.totalorder %s146, %s147
      %p161 = scmp.eq.s32.totalorder %s27, 1
      %p162 = por %p160, %p161
      %p164 = scmp.ne.s32.totalorder %s147, %s163
      %p165 = scmp.eq.s32.totalorder %s27, 0
      %p166 = por %p164, %p165
      %p167 = scmp.le.s32.totalorder 1, %s21
      %p168 = scmp.lt.s32.totalorder %s21, 3
      %p169 = pnand %p167, %p168
      %p170 = pneg %p169
      // Predicated region
      $region9: #{tpu_custom_call.1} parent=5 // pred_check
        _
      $region10: #{tpu_custom_call.1} parent=5 // pred_check_branch
        %172 = sbr.rel (%p169) target = $region12
      $region11: #{tpu_custom_call.1} parent=5 // pred_region
        %s173 = ssub.s32 %s21, 1
        // Predicated region
        $region13: #{tpu_custom_call.1} parent=11 // pred_check
          %p174 = pneg %p82
        $region14: #{tpu_custom_call.1} parent=11 // pred_check_branch
          %176 = sbr.rel (%p174) target = $region16
        $region15: #{tpu_custom_call.1} parent=11 // pred_region
          %s178 = ssub.s32 64, 64
          %179 = vsyncadd [#allocation5], %s178
          %182 = dma.hbm_to_smem %s1, 64, [#allocation6], [#allocation5]
        $region16: #{tpu_custom_call.1} parent=11 // pred_fallthru
          _
        // Predicated region
        $region17: #{tpu_custom_call.1} parent=11 // pred_check
          %p183 = pneg %p103
        $region18: #{tpu_custom_call.1} parent=11 // pred_check_branch
          %185 = sbr.rel (%p183) target = $region20
        $region19: #{tpu_custom_call.1} parent=11 // pred_region
          %s187 = ssub.s32 16, 16
          %188 = vsyncadd [#allocation8], %s187
          %191 = dma.hbm_to_smem %s2, 16, [#allocation7], [#allocation8]
        $region20: #{tpu_custom_call.1} parent=11 // pred_fallthru
          _
      $region12: #{tpu_custom_call.1} parent=5 // pred_fallthru
        _
      %p192 = scmp.lt.s32.totalorder %s21, 2
      // Predicated region
      $region21: #{tpu_custom_call.1} parent=5 // pred_check
        %p193 = pneg %p192
      $region22: #{tpu_custom_call.1} parent=5 // pred_check_branch
        %195 = sbr.rel (%p193) target = $region24
      $region23: #{tpu_custom_call.1} parent=5 // pred_region
        // Predicated region
        $region25: #{tpu_custom_call.1} parent=23 // pred_check
          %p196 = pneg %p55
        $region26: #{tpu_custom_call.1} parent=23 // pred_check_branch
          %198 = sbr.rel (%p196) target = $region28
        $region27: #{tpu_custom_call.1} parent=23 // pred_region
          %s199 = sand.u32 %s45, 1
          %s200 = scalar_lea.sflag [#allocation3], %s199
          %s201 = sand.u32 %s45, 1
          %s202 = smul.addr %s201, 8
          %s203 = scalar_lea.vmem [#allocation2], %s202
          %s205 = ssub.s32 128, 128
          %206 = vsyncadd %s200, %s205
          %s207 = smul.addr %s28, 4
          %s208 = sadd.s32 %s29, %s207
          %s209 = smul.addr %s208, 32
          %s210 = scalar_lea.hbm %s0, %s209
          %s211 = sshll.u32 %s203, 4
          %s212 = int_to_ptr.vmem [resolvable:$true] %s211
          %217 = dma.hbm_to_vmem [thread:$0]  %s210, 128, %s212, %s200, 32, 32, 2
        $region28: #{tpu_custom_call.1} parent=23 // pred_fallthru
          _
        // Predicated region
        $region29: #{tpu_custom_call.1} parent=23 // pred_check
          %p218 = pneg %p125
        $region30: #{tpu_custom_call.1} parent=23 // pred_check_branch
          %220 = sbr.rel (%p218) target = $region32
        $region31: #{tpu_custom_call.1} parent=23 // pred_region
          %s221 = sand.u32 %s115, 1
          %s222 = scalar_lea.sflag [#allocation10], %s221
          %s223 = sand.u32 %s115, 1
          %s224 = smul.addr %s223, 8
          %s225 = scalar_lea.vmem [#allocation9], %s224
          %s227 = ssub.s32 128, 128
          %228 = vsyncadd %s222, %s227
          %s229 = smul.addr %s28, 4
          %s230 = sadd.s32 %s29, %s229
          %s231 = smul.addr %s230, 32
          %s232 = scalar_lea.hbm %s3, %s231
          %s233 = sshll.u32 %s225, 4
          %s234 = int_to_ptr.vmem [resolvable:$true] %s233
          %239 = dma.hbm_to_vmem [thread:$0]  %s232, 128, %s234, %s222, 32, 32, 2
        $region32: #{tpu_custom_call.1} parent=23 // pred_fallthru
          _
      $region24: #{tpu_custom_call.1} parent=5 // pred_fallthru
        _
      %p240 = scmp.le.s32.totalorder 1, %s21
      %p241 = scmp.lt.s32.totalorder %s21, 3
      %p242 = pnand %p240, %p241
      %p243 = pneg %p242
      // Predicated region
      $region33: #{tpu_custom_call.1} parent=5 // pred_check
        _
      $region34: #{tpu_custom_call.1} parent=5 // pred_check_branch
        %245 = sbr.rel (%p242) target = $region36
      $region35: #{tpu_custom_call.1} parent=5 // pred_region
        %s246 = ssub.s32 %s21, 1
        %s247 = sand.u32 %s48, 1
        %s248 = scalar_lea.sflag [#allocation3], %s247
        %s249 = sand.u32 %s48, 1
        %s250 = smul.addr %s249, 8
        %s251 = scalar_lea.vmem [#allocation2], %s250
        // Predicated region
        $region37: #{tpu_custom_call.1} parent=35 // pred_check
          %p252 = pneg %p61
        $region38: #{tpu_custom_call.1} parent=35 // pred_check_branch
          %254 = sbr.rel (%p252) target = $region40
        $region39: #{tpu_custom_call.1} parent=35 // pred_region
          %255 = dma.done %s248, 128
        $region40: #{tpu_custom_call.1} parent=35 // pred_fallthru
          _
        // Predicated region
        $region41: #{tpu_custom_call.1} parent=35 // pred_check
          %p256 = pneg %p82
        $region42: #{tpu_custom_call.1} parent=35 // pred_check_branch
          %258 = sbr.rel (%p256) target = $region44
        $region43: #{tpu_custom_call.1} parent=35 // pred_region
          %259 = dma.done [#allocation5], 64
        $region44: #{tpu_custom_call.1} parent=35 // pred_fallthru
          _
        // Predicated region
        $region45: #{tpu_custom_call.1} parent=35 // pred_check
          %p260 = pneg %p103
        $region46: #{tpu_custom_call.1} parent=35 // pred_check_branch
          %262 = sbr.rel (%p260) target = $region48
        $region47: #{tpu_custom_call.1} parent=35 // pred_region
          %263 = dma.done [#allocation8], 16
        $region48: #{tpu_custom_call.1} parent=35 // pred_fallthru
          _
        %s264 = sand.u32 %s118, 1
        %s265 = scalar_lea.sflag [#allocation10], %s264
        %s266 = sand.u32 %s118, 1
        %s267 = smul.addr %s266, 8
        %s268 = scalar_lea.vmem [#allocation9], %s267
        // Predicated region
        $region49: #{tpu_custom_call.1} parent=35 // pred_check
          %p269 = pneg %p131
        $region50: #{tpu_custom_call.1} parent=35 // pred_check_branch
          %271 = sbr.rel (%p269) target = $region52
        $region51: #{tpu_custom_call.1} parent=35 // pred_region
          %272 = dma.done %s265, 128
        $region52: #{tpu_custom_call.1} parent=35 // pred_fallthru
          _
        %273 = sfence
        %s274 = sand.u32 %s48, 1
        %s275 = scalar_lea.sflag [#allocation3], %s274
        %s276 = sand.u32 %s48, 1
        %s277 = smul.addr %s276, 8
        %s278 = scalar_lea.vmem [#allocation2], %s277
        %p279 = pneg %p61
        %p280 = pneg %p58
        %p281 = pneg %p82
        %p282 = pneg %p79
        %p283 = pneg %p103
        %p284 = pneg %p100
        %s285 = sand.u32 %s118, 1
        %s286 = scalar_lea.sflag [#allocation10], %s285
        %s287 = sand.u32 %s118, 1
        %s288 = smul.addr %s287, 8
        %s289 = scalar_lea.vmem [#allocation9], %s288
        %p290 = pneg %p131
        %p291 = pneg %p128
        %p292 = pneg %p159
        %p293 = pneg %p156
        %s294 = sand.u32 %s146, 1
        %s295 = scalar_lea.sflag [#allocation4], %s294
        %s296 = sand.u32 %s146, 1
        %s297 = smul.addr %s296, 8
        %s298 = scalar_lea.vmem [#allocation11], %s297
        %s299 = sld [smem:[#allocation6]]
        %v300 = vld [vmem:[%s251] sm:$0x3]
        %v301 = vstv %s299
        %v302 = vmul.f32 %v301, %v300
        %s303 = sld [smem:[#allocation6 + $0x1]]
        %s304 = scalar_lea.vmem %s251, 2 [#allocation2]
        %v305 = vld [vmem:[%s304] sm:$0x3]
        %v306 = vstv %s303
        %v307 = vmul.f32 %v306, %v305
        %v308 = vadd.f32 %v302, %v307
        %s309 = sld [smem:[#allocation6 + $0x2]]
        %s310 = scalar_lea.vmem %s251, 4 [#allocation2]
        %v311 = vld [vmem:[%s310] sm:$0x3]
        %v312 = vstv %s309
        %v313 = vmul.f32 %v312, %v311
        %v314 = vadd.f32 %v308, %v313
        %s315 = sld [smem:[#allocation6 + $0x3]]
        %s316 = scalar_lea.vmem %s251, 6 [#allocation2]
        %v317 = vld [vmem:[%s316] sm:$0x3]
        %v318 = vstv %s315
        %v319 = vmul.f32 %v318, %v317
        %v320 = vadd.f32 %v314, %v319
        %s321 = sld [smem:[#allocation7]]
        %v322 = vstv %s321
        %v323 = vadd.f32 %v320, %v322
        %v324 = vtanh.pop %v323
        %v325 = vld [vmem:[%s268] sm:$0x3]
        %v326 = vmul.f32 %v325, %v324
        %327 = vst [vmem:[%s298] sm:$0x3] %v326
        %s328 = sld [smem:[#allocation6 + $0x80]]
        %v329 = vld [vmem:[%s251] sm:$0x3]
        %v330 = vstv %s328
        %v331 = vmul.f32 %v330, %v329
        %s332 = sld [smem:[#allocation6 + $0x81]]
        %v333 = vld [vmem:[%s304] sm:$0x3]
        %v334 = vstv %s332
        %v335 = vmul.f32 %v334, %v333
        %v336 = vadd.f32 %v331, %v335
        %s337 = sld [smem:[#allocation6 + $0x82]]
        %v338 = vld [vmem:[%s310] sm:$0x3]
        %v339 = vstv %s337
        %v340 = vmul.f32 %v339, %v338
        %v341 = vadd.f32 %v336, %v340
        %s342 = sld [smem:[#allocation6 + $0x83]]
        %v343 = vld [vmem:[%s316] sm:$0x3]
        %v344 = vstv %s342
        %v345 = vmul.f32 %v344, %v343
        %v346 = vadd.f32 %v341, %v345
        %s347 = sld [smem:[#allocation7 + $0x1]]
        %v348 = vstv %s347
        %v349 = vadd.f32 %v346, %v348
        %v350 = vtanh.pop %v349
        %s351 = scalar_lea.vmem %s268, 2 [#allocation9]
        %v352 = vld [vmem:[%s351] sm:$0x3]
        %v353 = vmul.f32 %v352, %v350
        %s354 = scalar_lea.vmem %s298, 2 [#allocation11]
        %355 = vst [vmem:[%s354] sm:$0x3] %v353
        %s356 = sld [smem:[#allocation6 + $0x100]]
        %v357 = vld [vmem:[%s251] sm:$0x3]
        %v358 = vstv %s356
        %v359 = vmul.f32 %v358, %v357
        %s360 = sld [smem:[#allocation6 + $0x101]]
        %v361 = vld [vmem:[%s304] sm:$0x3]
        %v362 = vstv %s360
        %v363 = vmul.f32 %v362, %v361
        %v364 = vadd.f32 %v359, %v363
        %s365 = sld [smem:[#allocation6 + $0x102]]
        %v366 = vld [vmem:[%s310] sm:$0x3]
        %v367 = vstv %s365
        %v368 = vmul.f32 %v367, %v366
        %v369 = vadd.f32 %v364, %v368
        %s370 = sld [smem:[#allocation6 + $0x103]]
        %v371 = vld [vmem:[%s316] sm:$0x3]
        %v372 = vstv %s370
        %v373 = vmul.f32 %v372, %v371
        %v374 = vadd.f32 %v369, %v373
        %s375 = sld [smem:[#allocation7 + $0x2]]
        %v376 = vstv %s375
        %v377 = vadd.f32 %v374, %v376
        %v378 = vtanh.pop %v377
        %s379 = scalar_lea.vmem %s268, 4 [#allocation9]
        %v380 = vld [vmem:[%s379] sm:$0x3]
        %v381 = vmul.f32 %v380, %v378
        %s382 = scalar_lea.vmem %s298, 4 [#allocation11]
        %383 = vst [vmem:[%s382] sm:$0x3] %v381
        %s384 = sld [smem:[#allocation6 + $0x180]]
        %v385 = vld [vmem:[%s251] sm:$0x3]
        %v386 = vstv %s384
        %v387 = vmul.f32 %v386, %v385
        %s388 = sld [smem:[#allocation6 + $0x181]]
        %v389 = vld [vmem:[%s304] sm:$0x3]
        %v390 = vstv %s388
        %v391 = vmul.f32 %v390, %v389
        %v392 = vadd.f32 %v387, %v391
        %s393 = sld [smem:[#allocation6 + $0x182]]
        %v394 = vld [vmem:[%s310] sm:$0x3]
        %v395 = vstv %s393
        %v396 = vmul.f32 %v395, %v394
        %v397 = vadd.f32 %v392, %v396
        %s398 = sld [smem:[#allocation6 + $0x183]]
        %v399 = vld [vmem:[%s316] sm:$0x3]
        %v400 = vstv %s398
        %v401 = vmul.f32 %v400, %v399
        %v402 = vadd.f32 %v397, %v401
        %s403 = sld [smem:[#allocation7 + $0x3]]
        %v404 = vstv %s403
        %v405 = vadd.f32 %v402, %v404
        %v406 = vtanh.pop %v405
        %s407 = scalar_lea.vmem %s268, 6 [#allocation9]
        %v408 = vld [vmem:[%s407] sm:$0x3]
        %v409 = vmul.f32 %v408, %v406
        %s410 = scalar_lea.vmem %s298, 6 [#allocation11]
        %411 = vst [vmem:[%s410] sm:$0x3] %v409
        %s412 = sand.u32 %s146, 1
        %s413 = scalar_lea.sflag [#allocation4], %s412
        %s414 = sand.u32 %s146, 1
        %s415 = smul.addr %s414, 8
        %s416 = scalar_lea.vmem [#allocation11], %s415
        // Predicated region
        $region53: #{tpu_custom_call.1} parent=35 // pred_check
          %p417 = pneg %p156
        $region54: #{tpu_custom_call.1} parent=35 // pred_check_branch
          %419 = sbr.rel (%p417) target = $region56
        $region55: #{tpu_custom_call.1} parent=35 // pred_region
          %s421 = ssub.s32 128, 128
          %422 = vsyncadd %s413, %s421
          %s423 = smul.addr %s30, 4
          %s424 = sadd.s32 %s31, %s423
          %s425 = smul.addr %s424, 32
          %s426 = scalar_lea.hbm %s4, %s425
          %s427 = sshll.u32 %s416, 4
          %s428 = int_to_ptr.vmem [resolvable:$true] %s427
          %433 = dma.vmem_to_hbm [thread:$0]  %s428, 128, %s426, %s413, 32, 32, 2
        $region56: #{tpu_custom_call.1} parent=35 // pred_fallthru
          _
      $region36: #{tpu_custom_call.1} parent=5 // pred_fallthru
        _
      %p434 = scmp.le.s32.totalorder 2, %s21
      // Predicated region
      $region57: #{tpu_custom_call.1} parent=5 // pred_check
        %p435 = pneg %p434
      $region58: #{tpu_custom_call.1} parent=5 // pred_check_branch
        %437 = sbr.rel (%p435) target = $region60
      $region59: #{tpu_custom_call.1} parent=5 // pred_region
        %s438 = ssub.s32 %s21, 2
        // Predicated region
        $region61: #{tpu_custom_call.1} parent=59 // pred_check
          %p439 = pneg %p162
        $region62: #{tpu_custom_call.1} parent=59 // pred_check_branch
          %441 = sbr.rel (%p439) target = $region64
        $region63: #{tpu_custom_call.1} parent=59 // pred_region
          %s442 = sand.u32 %s147, 1
          %s443 = scalar_lea.sflag [#allocation4], %s442
          %s444 = sand.u32 %s147, 1
          %s445 = smul.addr %s444, 8
          %s446 = scalar_lea.vmem [#allocation11], %s445
          %447 = dma.done %s443, 128
        $region64: #{tpu_custom_call.1} parent=59 // pred_fallthru
          _
      $region60: #{tpu_custom_call.1} parent=5 // pred_fallthru
        _
    $region6: #{tpu_custom_call.1} parent=1 // loop_footer
      %s25 = sadd.s32 1, %s21
    $region7: #{tpu_custom_call.1} parent=1 // loop_footer_branch
      %20 = sbr.rel target = $region3
    $region8: #{tpu_custom_call.1} parent=1 // loop_exit
      _
    %448 = vsyncpa [#allocation3], 1
    %s449 = scalar_lea.sflag [#allocation3], 1
    %450 = vsyncpa %s449, 1
    %451 = vsyncpa [#allocation10], 1
    %s452 = scalar_lea.sflag [#allocation10], 1
    %453 = vsyncpa %s452, 1
    %454 = vsyncpa [#allocation4], 1
    %s455 = scalar_lea.sflag [#allocation4], 1
    %456 = vsyncpa %s455, 1
    %457 = vsyncpa [#allocation5], 1
    %s458 = scalar_lea.sflag [#allocation5], 1
    %459 = vsyncpa %s458, 1
    %460 = vsyncpa [#allocation8], 1

</llo_original>
